<compile_context>
chip_gen: v5e
topology: v5e:2x2
jax: 0.10.0
libtpu: 0.0.40
codegen_flags: <defaults>
</compile_context>

<pallas_src>
import math

import jax
import jax.numpy as jnp
from jax.experimental import pallas as pl
from jax.experimental.pallas import tpu as pltpu

_MXU_DTYPE = jnp.bfloat16          # explicit MXU operand dtype (not inferred)


def _cross_attn_kernel(x_ref, y_ref,
                       wq_ref, bq_ref,
                       wk_ref, bk_ref,
                       wv_ref, bv_ref,
                       wo_ref, bo_ref,
                       o_ref,
                       k_scr, v_scr, q_scr, ctx_scr):
    """Grid = (batch, Lq tiles); one step = one query tile of one batch element."""
    n_heads, _, d_head = k_scr.shape
    qi = pl.program_id(1)

    # --- K/V projections: once per batch element, cached head-major in VMEM.
    @pl.when(qi == 0)
    def _():
        y = y_ref[0].astype(_MXU_DTYPE)                                     # (Lk, Dc)
        k = jnp.dot(y, wk_ref[...], preferred_element_type=jnp.float32) + bk_ref[...]
        v = jnp.dot(y, wv_ref[...], preferred_element_type=jnp.float32) + bv_ref[...]
        k = k.astype(_MXU_DTYPE)
        v = v.astype(_MXU_DTYPE)
        for h in range(n_heads):                 # static; once per batch element
            sl = slice(h * d_head, (h + 1) * d_head)
            k_scr[h] = k[:, sl]
            v_scr[h] = v[:, sl]

    # --- Q projection for this tile (softmax scale folded into wq/bq), then
    #     laid out head-major (H, tq, d_head) once per tile.
    x = x_ref[0].astype(_MXU_DTYPE)                                         # (tq, De)
    q = jnp.dot(x, wq_ref[...], preferred_element_type=jnp.float32) + bq_ref[...]
    q = q.astype(_MXU_DTYPE)
    for h in range(n_heads):
        q_scr[h] = q[:, h * d_head:(h + 1) * d_head]

    # --- Head-batched attention: QK^T / softmax / P·V with heads as the
    #     dot_general batch dim (no per-head Python loop of 2-D dots).
    s = jnp.einsum("hqd,hkd->hqk", q_scr[...], k_scr[...],
                   preferred_element_type=jnp.float32)                      # (H, tq, Lk)
    m = jnp.max(s, axis=-1, keepdims=True)
    e = jnp.exp(s - m)
    # EUP approx reciprocal: probability rows sum to 1 only to ~1e-3/1e-4 rel.
    p = e * pl.reciprocal(jnp.sum(e, axis=-1, keepdims=True), approx=True)
    ctx = jnp.einsum("hqk,hkd->hqd", p.astype(_MXU_DTYPE), v_scr[...],
                     preferred_element_type=jnp.float32)                    # (H, tq, dh)
    ctx = ctx.astype(_MXU_DTYPE)

    # --- Reassemble context lane-dense so the output projection is a SINGLE
    #     (tq, De) x (De, De) matmul (full d_embed contraction on the MXU).
    for h in range(n_heads):
        ctx_scr[:, h * d_head:(h + 1) * d_head] = ctx[h]
    out = jnp.dot(ctx_scr[...], wo_ref[...],
                  preferred_element_type=jnp.float32) + bo_ref[...]         # (tq, De)
    o_ref[0] = out.astype(o_ref.dtype)


def _ceil_to(x, m):
    return -(-x // m) * m


def _buf_bytes(shape, dtype):
    """Approx VMEM footprint of one buffer with (8, 128)-padded trailing dims."""
    shape = list(shape)
    if len(shape) >= 1:
        shape[-1] = _ceil_to(shape[-1], 128)
    if len(shape) >= 2:
        shape[-2] = _ceil_to(shape[-2], 8)
    n = 1
    for s in shape:
        n *= s
    return n * jnp.dtype(dtype).itemsize


def _vmem_capacity_bytes():
    try:
        return int(pltpu.get_tpu_info().vmem_capacity_bytes)
    except Exception:
        return 64 * 1024 * 1024          # conservative (v7x-sized) fallback


def cross_attention(x, y, params, n_heads, *, block_q=None):
    """x: (B, Lq, d_embed), y: (B, Lk, d_cross) -> (B, Lq, d_embed)."""
    wq, bq, wk, bk, wv, bv, wo, bo = params
    B, Lq, De = x.shape
    _, Lk, Dc = y.shape
    assert De % n_heads == 0, "d_embed must be divisible by n_heads"
    d_head = De // n_heads
    scale = 1.0 / math.sqrt(d_head)
    out_dtype = x.dtype
    f32 = jnp.float32

    vmem_cap = _vmem_capacity_bytes()

    # Generation-dependent default query tile: bigger tiles amortize per-step
    # overhead on v5e/v6e (128 MiB VMEM); stay smaller for v7x (64 MiB).
    if block_q is None:
        block_q = 1024 if vmem_cap >= 96 * 1024 * 1024 else 512
    tq = min(block_q, Lq)
    assert Lq % tq == 0, "Lq must be divisible by the query tile size"
    assert tq % 8 == 0 or tq == Lq, "query tile must be sublane-aligned"
    n_q = Lq // tq

    # Weight prep: bf16 MXU operands, f32 biases, 1/sqrt(d_head) folded into
    # the Q projection (weight AND bias).  Under jit with constant weights this
    # folds away; callers with traced weights should hoist it out of hot loops.
    as_bias = lambda b: jnp.asarray(b, f32).reshape(1, De)
    wq_c = (jnp.asarray(wq, f32) * scale).astype(_MXU_DTYPE)                # (De, De)
    wk_c = jnp.asarray(wk).astype(_MXU_DTYPE)                               # (Dc, De)
    wv_c = jnp.asarray(wv).astype(_MXU_DTYPE)                               # (Dc, De)
    wo_c = jnp.asarray(wo).astype(_MXU_DTYPE)                               # (De, De)
    bq_c = as_bias(bq) * scale
    bk_c, bv_c, bo_c = as_bias(bk), as_bias(bv), as_bias(bo)

    # Constant-index blocks: single-buffered -- they are never re-fetched, so
    # default double-buffering would only duplicate weight bytes in VMEM.
    def const_spec(shape):
        return pl.BlockSpec(shape, lambda b, qi: (0,) * len(shape),
                            pipeline_mode=pl.Buffered(1))

    # Derive the VMEM limit from the actual buffers (clamped to device capacity
    # so v7x's 64 MiB is respected while v5e/v6e can run large query tiles).
    weights_bytes = (2 * _buf_bytes((De, De), _MXU_DTYPE)
                     + 2 * _buf_bytes((Dc, De), _MXU_DTYPE)
                     + 4 * _buf_bytes((1, De), f32))
    pipeline_bytes = 2 * (_buf_bytes((tq, De), x.dtype)
                          + _buf_bytes((Lk, Dc), y.dtype)
                          + _buf_bytes((tq, De), out_dtype))
    scratch_bytes = (2 * n_heads * _buf_bytes((Lk, d_head), _MXU_DTYPE)
                     + n_heads * _buf_bytes((tq, d_head), _MXU_DTYPE)
                     + _buf_bytes((tq, De), _MXU_DTYPE))
    temp_bytes = (2 * _buf_bytes((tq, De), f32)
                  + 3 * n_heads * _buf_bytes((tq, Lk), f32)
                  + n_heads * _buf_bytes((tq, d_head), f32)
                  + 2 * _buf_bytes((Lk, De), f32))
    vmem_need = (weights_bytes + pipeline_bytes + scratch_bytes + temp_bytes
                 + 4 * 1024 * 1024)
    vmem_limit = int(min(max(vmem_need, 32 * 1024 * 1024), 0.875 * vmem_cap))

    return pl.pallas_call(
        _cross_attn_kernel,
        out_shape=jax.ShapeDtypeStruct((B, Lq, De), out_dtype),
        grid=(B, n_q),
        in_specs=[
            pl.BlockSpec((1, tq, De), lambda b, qi: (b, qi, 0)),            # x tile
            pl.BlockSpec((1, Lk, Dc), lambda b, qi: (b, 0, 0)),             # y (full ctx)
            const_spec((De, De)), const_spec((1, De)),                      # wq*s, bq*s
            const_spec((Dc, De)), const_spec((1, De)),                      # wk, bk
            const_spec((Dc, De)), const_spec((1, De)),                      # wv, bv
            const_spec((De, De)), const_spec((1, De)),                      # wo, bo
        ],
        out_specs=pl.BlockSpec((1, tq, De), lambda b, qi: (b, qi, 0)),
        scratch_shapes=[
            pltpu.VMEM((n_heads, Lk, d_head), _MXU_DTYPE),                  # cached K
            pltpu.VMEM((n_heads, Lk, d_head), _MXU_DTYPE),                  # cached V
            pltpu.VMEM((n_heads, tq, d_head), _MXU_DTYPE),                  # q, head-major
            pltpu.VMEM((tq, De), _MXU_DTYPE),                               # ctx, lane-dense
        ],
        compiler_params=pltpu.CompilerParams(
            # B shards across megacore TCs; the Lq-tile axis must stay
            # sequential so the qi==0 K/V scratch fill is seen by later tiles.
            dimension_semantics=("parallel", "arbitrary"),
            vmem_limit_bytes=vmem_limit,
        ),
    )(x, y, wq_c, bq_c, wk_c, bk_c, wv_c, bv_c, wo_c, bo_c)


def reference_cross_attention(x, y, params, n_heads, matmul_dtype=jnp.bfloat16):
    """Pure-JAX reference with the PyTorch module's (intended) semantics.

    Matmul operands are cast to `matmul_dtype` with f32 accumulation and the
    1/sqrt(d_head) scale is folded into the Q projection, matching the kernel's
    numerics so the comparison tolerance can stay tight.
    """
    wq, bq, wk, bk, wv, bv, wo, bo = params
    B, Lq, De = x.shape
    dh = De // n_heads
    scale = 1.0 / math.sqrt(dh)

    def mm(a, w):
        return jnp.dot(a.astype(matmul_dtype), w.astype(matmul_dtype),
                       preferred_element_type=jnp.float32)

    q = mm(x, wq * scale) + bq * scale
    k = mm(y, wk) + bk
    v = mm(y, wv) + bv
    q = q.reshape(B, Lq, n_heads, dh).transpose(0, 2, 1, 3)
    k = k.reshape(B, -1, n_heads, dh).transpose(0, 2, 1, 3)
    v = v.reshape(B, -1, n_heads, dh).transpose(0, 2, 1, 3)
    s = jnp.einsum("bhqd,bhkd->bhqk", q.astype(matmul_dtype), k.astype(matmul_dtype),
                   preferred_element_type=jnp.float32)
    p = jax.nn.softmax(s, axis=-1)
    o = jnp.einsum("bhqk,bhkd->bhqd", p.astype(matmul_dtype), v.astype(matmul_dtype),
                   preferred_element_type=jnp.float32)
    o = o.transpose(0, 2, 1, 3).reshape(B, Lq, De)
    return mm(o, wo) + bo


if __name__ == "__main__":
    # Small shapes consistent with the module.
    B, Lq, Lk = 2, 16, 8
    n_heads, d_embed, d_cross = 4, 32, 24

    key = jax.random.PRNGKey(0)
    ks = jax.random.split(key, 6)
    x = jax.random.normal(ks[0], (B, Lq, d_embed), jnp.float32)
    y = jax.random.normal(ks[1], (B, Lk, d_cross), jnp.float32)

    # Deterministic parameter init (weights stored as (in, out)).
    def init_w(k, fan_in, fan_out):
        return jax.random.normal(k, (fan_in, fan_out), jnp.float32) / math.sqrt(fan_in)

    params = (
        init_w(ks[2], d_embed, d_embed), 0.01 * jnp.ones((1, d_embed), jnp.float32),  # q_proj
        init_w(ks[3], d_cross, d_embed), 0.02 * jnp.ones((1, d_embed), jnp.float32),  # k_proj
        init_w(ks[4], d_cross, d_embed), 0.03 * jnp.ones((1, d_embed), jnp.float32),  # v_proj
        init_w(ks[5], d_embed, d_embed), 0.04 * jnp.ones((1, d_embed), jnp.float32),  # out_proj
    )

    # block_q=8 -> two Lq tiles per batch element, exercising the K/V scratch
    # caching path (pl.when on the tile index).
    out = cross_attention(x, y, params, n_heads, block_q=8)
    out = jax.block_until_ready(out)

    ref = reference_cross_attention(x, y, params, n_heads)
    assert out.shape == (B, Lq, d_embed)
    assert jnp.allclose(out, ref, atol=1e-2, rtol=1e-2), "mismatch vs JAX reference"

    print("KERNEL_OK")
</pallas_src>

<mosaic_0001>
module attributes {stable_mosaic.version = 11 : i64} {
  func.func @_cross_attn_kernel(%arg0: i32, %arg1: i32, %arg2: memref<1x8x32xf32, #tpu.memory_space<vmem>>, %arg3: memref<1x8x24xf32, #tpu.memory_space<vmem>>, %arg4: memref<32x32xbf16, #tpu.memory_space<vmem>>, %arg5: memref<1x32xf32, #tpu.memory_space<vmem>>, %arg6: memref<24x32xbf16, #tpu.memory_space<vmem>>, %arg7: memref<1x32xf32, #tpu.memory_space<vmem>>, %arg8: memref<24x32xbf16, #tpu.memory_space<vmem>>, %arg9: memref<1x32xf32, #tpu.memory_space<vmem>>, %arg10: memref<32x32xbf16, #tpu.memory_space<vmem>>, %arg11: memref<1x32xf32, #tpu.memory_space<vmem>>, %arg12: memref<1x8x32xf32, #tpu.memory_space<vmem>>, %arg13: memref<4x8x8xbf16, #tpu.memory_space<vmem>>, %arg14: memref<4x8x8xbf16, #tpu.memory_space<vmem>>, %arg15: memref<4x8x8xbf16, #tpu.memory_space<vmem>>, %arg16: memref<8x32xbf16, #tpu.memory_space<vmem>>) attributes {dimension_semantics = [#tpu.dimension_semantics<parallel>, #tpu.dimension_semantics<arbitrary>], iteration_bounds = array<i64: 2, 2>, scalar_prefetch = 0 : i64, scratch_operands = 4 : i64, tpu.core_type = #tpu.core_type<tc>, window_params = [{transform_indices = @transform_0, window_bounds = array<i64: 1, 8, 32>}, {transform_indices = @transform_1, window_bounds = array<i64: 1, 8, 24>}, {pipeline_mode = #tpu.pipeline_mode<synchronous>, transform_indices = @transform_2, window_bounds = array<i64: 32, 32>}, {pipeline_mode = #tpu.pipeline_mode<synchronous>, transform_indices = @transform_3, window_bounds = array<i64: 1, 32>}, {pipeline_mode = #tpu.pipeline_mode<synchronous>, transform_indices = @transform_4, window_bounds = array<i64: 24, 32>}, {pipeline_mode = #tpu.pipeline_mode<synchronous>, transform_indices = @transform_5, window_bounds = array<i64: 1, 32>}, {pipeline_mode = #tpu.pipeline_mode<synchronous>, transform_indices = @transform_6, window_bounds = array<i64: 24, 32>}, {pipeline_mode = #tpu.pipeline_mode<synchronous>, transform_indices = @transform_7, window_bounds = array<i64: 1, 32>}, {pipeline_mode = #tpu.pipeline_mode<synchronous>, transform_indices = @transform_8, window_bounds = array<i64: 32, 32>}, {pipeline_mode = #tpu.pipeline_mode<synchronous>, transform_indices = @transform_9, window_bounds = array<i64: 1, 32>}, {transform_indices = @transform_10, window_bounds = array<i64: 1, 8, 32>}]} {
    %c0_i32 = arith.constant 0 : i32
    %0 = arith.cmpi eq, %arg1, %c0_i32 : i32
    %1 = arith.extui %0 : i1 to i32
    %c0_i32_0 = arith.constant 0 : i32
    %2 = arith.cmpi ne, %1, %c0_i32_0 : i32
    scf.if %2 {
      %c0_44 = arith.constant 0 : index
      %c0_45 = arith.constant 0 : index
      %c0_46 = arith.constant 0 : index
      %66 = vector.load %arg3[%c0_44, %c0_45, %c0_46] : memref<1x8x24xf32, #tpu.memory_space<vmem>>, vector<1x8x24xf32>
      %67 = vector.shape_cast %66 : vector<1x8x24xf32> to vector<8x24xf32>
      %68 = arith.truncf %67 : vector<8x24xf32> to vector<8x24xbf16>
      %c0_47 = arith.constant 0 : index
      %c0_48 = arith.constant 0 : index
      %69 = vector.load %arg6[%c0_47, %c0_48] : memref<24x32xbf16, #tpu.memory_space<vmem>>, vector<24x32xbf16>
      %cst_49 = arith.constant dense<0.000000e+00> : vector<8x32xf32>
      %70 = tpu.matmul %68, %69, %cst_49 {dimension_numbers = #tpu.dot_dimension_numbers<[1], [0], [0], [1], [0, 0, 1, 1], [], []>} : vector<8x24xbf16>, vector<24x32xbf16>, vector<8x32xf32> -> vector<8x32xf32>
      %c0_50 = arith.constant 0 : index
      %c0_51 = arith.constant 0 : index
      %71 = vector.load %arg7[%c0_50, %c0_51] : memref<1x32xf32, #tpu.memory_space<vmem>>, vector<1x32xf32>
      %72 = vector.broadcast %71 : vector<1x32xf32> to vector<8x32xf32>
      %73 = arith.addf %70, %72 : vector<8x32xf32>
      %c0_52 = arith.constant 0 : index
      %c0_53 = arith.constant 0 : index
      %74 = vector.load %arg8[%c0_52, %c0_53] : memref<24x32xbf16, #tpu.memory_space<vmem>>, vector<24x32xbf16>
      %cst_54 = arith.constant dense<0.000000e+00> : vector<8x32xf32>
      %75 = tpu.matmul %68, %74, %cst_54 {dimension_numbers = #tpu.dot_dimension_numbers<[1], [0], [0], [1], [0, 0, 1, 1], [], []>} : vector<8x24xbf16>, vector<24x32xbf16>, vector<8x32xf32> -> vector<8x32xf32>
      %c0_55 = arith.constant 0 : index
      %c0_56 = arith.constant 0 : index
      %76 = vector.load %arg9[%c0_55, %c0_56] : memref<1x32xf32, #tpu.memory_space<vmem>>, vector<1x32xf32>
      %77 = vector.broadcast %76 : vector<1x32xf32> to vector<8x32xf32>
      %78 = arith.addf %75, %77 : vector<8x32xf32>
      %79 = arith.truncf %73 : vector<8x32xf32> to vector<8x32xbf16>
      %80 = arith.truncf %78 : vector<8x32xf32> to vector<8x32xbf16>
      %81 = vector.extract_strided_slice %79 {offsets = [0, 0], sizes = [8, 8], strides = [1, 1]} : vector<8x32xbf16> to vector<8x8xbf16>
      %c0_57 = arith.constant 0 : index
      %c0_58 = arith.constant 0 : index
      %c0_59 = arith.constant 0 : index
      %82 = vector.load %arg13[%c0_57, %c0_58, %c0_59] : memref<4x8x8xbf16, #tpu.memory_space<vmem>>, vector<1x8x8xbf16>
      %83 = vector.shape_cast %82 : vector<1x8x8xbf16> to vector<8x8xbf16>
      %84 = vector.shape_cast %81 : vector<8x8xbf16> to vector<1x8x8xbf16>
      tpu.vector_store %arg13[%c0_57, %c0_58, %c0_59], %84 {strides = array<i32>} : memref<4x8x8xbf16, #tpu.memory_space<vmem>>, vector<1x8x8xbf16>,
      %85 = vector.extract_strided_slice %80 {offsets = [0, 0], sizes = [8, 8], strides = [1, 1]} : vector<8x32xbf16> to vector<8x8xbf16>
      %c0_60 = arith.constant 0 : index
      %c0_61 = arith.constant 0 : index
      %c0_62 = arith.constant 0 : index
      %86 = vector.load %arg14[%c0_60, %c0_61, %c0_62] : memref<4x8x8xbf16, #tpu.memory_space<vmem>>, vector<1x8x8xbf16>
      %87 = vector.shape_cast %86 : vector<1x8x8xbf16> to vector<8x8xbf16>
      %88 = vector.shape_cast %85 : vector<8x8xbf16> to vector<1x8x8xbf16>
      tpu.vector_store %arg14[%c0_60, %c0_61, %c0_62], %88 {strides = array<i32>} : memref<4x8x8xbf16, #tpu.memory_space<vmem>>, vector<1x8x8xbf16>,
      %89 = vector.extract_strided_slice %79 {offsets = [0, 8], sizes = [8, 8], strides = [1, 1]} : vector<8x32xbf16> to vector<8x8xbf16>
      %c1_63 = arith.constant 1 : index
      %c0_64 = arith.constant 0 : index
      %c0_65 = arith.constant 0 : index
      %90 = vector.load %arg13[%c1_63, %c0_64, %c0_65] : memref<4x8x8xbf16, #tpu.memory_space<vmem>>, vector<1x8x8xbf16>
      %91 = vector.shape_cast %90 : vector<1x8x8xbf16> to vector<8x8xbf16>
      %92 = vector.shape_cast %89 : vector<8x8xbf16> to vector<1x8x8xbf16>
      tpu.vector_store %arg13[%c1_63, %c0_64, %c0_65], %92 {strides = array<i32>} : memref<4x8x8xbf16, #tpu.memory_space<vmem>>, vector<1x8x8xbf16>,
      %93 = vector.extract_strided_slice %80 {offsets = [0, 8], sizes = [8, 8], strides = [1, 1]} : vector<8x32xbf16> to vector<8x8xbf16>
      %c1_66 = arith.constant 1 : index
      %c0_67 = arith.constant 0 : index
      %c0_68 = arith.constant 0 : index
      %94 = vector.load %arg14[%c1_66, %c0_67, %c0_68] : memref<4x8x8xbf16, #tpu.memory_space<vmem>>, vector<1x8x8xbf16>
      %95 = vector.shape_cast %94 : vector<1x8x8xbf16> to vector<8x8xbf16>
      %96 = vector.shape_cast %93 : vector<8x8xbf16> to vector<1x8x8xbf16>
      tpu.vector_store %arg14[%c1_66, %c0_67, %c0_68], %96 {strides = array<i32>} : memref<4x8x8xbf16, #tpu.memory_space<vmem>>, vector<1x8x8xbf16>,
      %97 = vector.extract_strided_slice %79 {offsets = [0, 16], sizes = [8, 8], strides = [1, 1]} : vector<8x32xbf16> to vector<8x8xbf16>
      %c2_69 = arith.constant 2 : index
      %c0_70 = arith.constant 0 : index
      %c0_71 = arith.constant 0 : index
      %98 = vector.load %arg13[%c2_69, %c0_70, %c0_71] : memref<4x8x8xbf16, #tpu.memory_space<vmem>>, vector<1x8x8xbf16>
      %99 = vector.shape_cast %98 : vector<1x8x8xbf16> to vector<8x8xbf16>
      %100 = vector.shape_cast %97 : vector<8x8xbf16> to vector<1x8x8xbf16>
      tpu.vector_store %arg13[%c2_69, %c0_70, %c0_71], %100 {strides = array<i32>} : memref<4x8x8xbf16, #tpu.memory_space<vmem>>, vector<1x8x8xbf16>,
      %101 = vector.extract_strided_slice %80 {offsets = [0, 16], sizes = [8, 8], strides = [1, 1]} : vector<8x32xbf16> to vector<8x8xbf16>
      %c2_72 = arith.constant 2 : index
      %c0_73 = arith.constant 0 : index
      %c0_74 = arith.constant 0 : index
      %102 = vector.load %arg14[%c2_72, %c0_73, %c0_74] : memref<4x8x8xbf16, #tpu.memory_space<vmem>>, vector<1x8x8xbf16>
      %103 = vector.shape_cast %102 : vector<1x8x8xbf16> to vector<8x8xbf16>
      %104 = vector.shape_cast %101 : vector<8x8xbf16> to vector<1x8x8xbf16>
      tpu.vector_store %arg14[%c2_72, %c0_73, %c0_74], %104 {strides = array<i32>} : memref<4x8x8xbf16, #tpu.memory_space<vmem>>, vector<1x8x8xbf16>,
      %105 = vector.extract_strided_slice %79 {offsets = [0, 24], sizes = [8, 8], strides = [1, 1]} : vector<8x32xbf16> to vector<8x8xbf16>
      %c3_75 = arith.constant 3 : index
      %c0_76 = arith.constant 0 : index
      %c0_77 = arith.constant 0 : index
      %106 = vector.load %arg13[%c3_75, %c0_76, %c0_77] : memref<4x8x8xbf16, #tpu.memory_space<vmem>>, vector<1x8x8xbf16>
      %107 = vector.shape_cast %106 : vector<1x8x8xbf16> to vector<8x8xbf16>
      %108 = vector.shape_cast %105 : vector<8x8xbf16> to vector<1x8x8xbf16>
      tpu.vector_store %arg13[%c3_75, %c0_76, %c0_77], %108 {strides = array<i32>} : memref<4x8x8xbf16, #tpu.memory_space<vmem>>, vector<1x8x8xbf16>,
      %109 = vector.extract_strided_slice %80 {offsets = [0, 24], sizes = [8, 8], strides = [1, 1]} : vector<8x32xbf16> to vector<8x8xbf16>
      %c3_78 = arith.constant 3 : index
      %c0_79 = arith.constant 0 : index
      %c0_80 = arith.constant 0 : index
      %110 = vector.load %arg14[%c3_78, %c0_79, %c0_80] : memref<4x8x8xbf16, #tpu.memory_space<vmem>>, vector<1x8x8xbf16>
      %111 = vector.shape_cast %110 : vector<1x8x8xbf16> to vector<8x8xbf16>
      %112 = vector.shape_cast %109 : vector<8x8xbf16> to vector<1x8x8xbf16>
      tpu.vector_store %arg14[%c3_78, %c0_79, %c0_80], %112 {strides = array<i32>} : memref<4x8x8xbf16, #tpu.memory_space<vmem>>, vector<1x8x8xbf16>,
    } else {
    }
    %c0 = arith.constant 0 : index
    %c0_1 = arith.constant 0 : index
    %c0_2 = arith.constant 0 : index
    %3 = vector.load %arg2[%c0, %c0_1, %c0_2] : memref<1x8x32xf32, #tpu.memory_space<vmem>>, vector<1x8x32xf32>
    %4 = vector.shape_cast %3 : vector<1x8x32xf32> to vector<8x32xf32>
    %5 = arith.truncf %4 : vector<8x32xf32> to vector<8x32xbf16>
    %c0_3 = arith.constant 0 : index
    %c0_4 = arith.constant 0 : index
    %6 = vector.load %arg4[%c0_3, %c0_4] : memref<32x32xbf16, #tpu.memory_space<vmem>>, vector<32x32xbf16>
    %cst = arith.constant dense<0.000000e+00> : vector<8x32xf32>
    %7 = tpu.matmul %5, %6, %cst {dimension_numbers = #tpu.dot_dimension_numbers<[1], [0], [0], [1], [0, 0, 1, 1], [], []>} : vector<8x32xbf16>, vector<32x32xbf16>, vector<8x32xf32> -> vector<8x32xf32>
    %c0_5 = arith.constant 0 : index
    %c0_6 = arith.constant 0 : index
    %8 = vector.load %arg5[%c0_5, %c0_6] : memref<1x32xf32, #tpu.memory_space<vmem>>, vector<1x32xf32>
    %9 = vector.broadcast %8 : vector<1x32xf32> to vector<8x32xf32>
    %10 = arith.addf %7, %9 : vector<8x32xf32>
    %11 = arith.truncf %10 : vector<8x32xf32> to vector<8x32xbf16>
    %12 = vector.extract_strided_slice %11 {offsets = [0, 0], sizes = [8, 8], strides = [1, 1]} : vector<8x32xbf16> to vector<8x8xbf16>
    %c0_7 = arith.constant 0 : index
    %c0_8 = arith.constant 0 : index
    %c0_9 = arith.constant 0 : index
    %13 = vector.load %arg15[%c0_7, %c0_8, %c0_9] : memref<4x8x8xbf16, #tpu.memory_space<vmem>>, vector<1x8x8xbf16>
    %14 = vector.shape_cast %13 : vector<1x8x8xbf16> to vector<8x8xbf16>
    %15 = vector.shape_cast %12 : vector<8x8xbf16> to vector<1x8x8xbf16>
    tpu.vector_store %arg15[%c0_7, %c0_8, %c0_9], %15 {strides = array<i32>} : memref<4x8x8xbf16, #tpu.memory_space<vmem>>, vector<1x8x8xbf16>,
    %16 = vector.extract_strided_slice %11 {offsets = [0, 8], sizes = [8, 8], strides = [1, 1]} : vector<8x32xbf16> to vector<8x8xbf16>
    %c1 = arith.constant 1 : index
    %c0_10 = arith.constant 0 : index
    %c0_11 = arith.constant 0 : index
    %17 = vector.load %arg15[%c1, %c0_10, %c0_11] : memref<4x8x8xbf16, #tpu.memory_space<vmem>>, vector<1x8x8xbf16>
    %18 = vector.shape_cast %17 : vector<1x8x8xbf16> to vector<8x8xbf16>
    %19 = vector.shape_cast %16 : vector<8x8xbf16> to vector<1x8x8xbf16>
    tpu.vector_store %arg15[%c1, %c0_10, %c0_11], %19 {strides = array<i32>} : memref<4x8x8xbf16, #tpu.memory_space<vmem>>, vector<1x8x8xbf16>,
    %20 = vector.extract_strided_slice %11 {offsets = [0, 16], sizes = [8, 8], strides = [1, 1]} : vector<8x32xbf16> to vector<8x8xbf16>
    %c2 = arith.constant 2 : index
    %c0_12 = arith.constant 0 : index
    %c0_13 = arith.constant 0 : index
    %21 = vector.load %arg15[%c2, %c0_12, %c0_13] : memref<4x8x8xbf16, #tpu.memory_space<vmem>>, vector<1x8x8xbf16>
    %22 = vector.shape_cast %21 : vector<1x8x8xbf16> to vector<8x8xbf16>
    %23 = vector.shape_cast %20 : vector<8x8xbf16> to vector<1x8x8xbf16>
    tpu.vector_store %arg15[%c2, %c0_12, %c0_13], %23 {strides = array<i32>} : memref<4x8x8xbf16, #tpu.memory_space<vmem>>, vector<1x8x8xbf16>,
    %24 = vector.extract_strided_slice %11 {offsets = [0, 24], sizes = [8, 8], strides = [1, 1]} : vector<8x32xbf16> to vector<8x8xbf16>
    %c3 = arith.constant 3 : index
    %c0_14 = arith.constant 0 : index
    %c0_15 = arith.constant 0 : index
    %25 = vector.load %arg15[%c3, %c0_14, %c0_15] : memref<4x8x8xbf16, #tpu.memory_space<vmem>>, vector<1x8x8xbf16>
    %26 = vector.shape_cast %25 : vector<1x8x8xbf16> to vector<8x8xbf16>
    %27 = vector.shape_cast %24 : vector<8x8xbf16> to vector<1x8x8xbf16>
    tpu.vector_store %arg15[%c3, %c0_14, %c0_15], %27 {strides = array<i32>} : memref<4x8x8xbf16, #tpu.memory_space<vmem>>, vector<1x8x8xbf16>,
    %c0_16 = arith.constant 0 : index
    %c0_17 = arith.constant 0 : index
    %c0_18 = arith.constant 0 : index
    %28 = vector.load %arg15[%c0_16, %c0_17, %c0_18] : memref<4x8x8xbf16, #tpu.memory_space<vmem>>, vector<4x8x8xbf16>
    %c0_19 = arith.constant 0 : index
    %c0_20 = arith.constant 0 : index
    %c0_21 = arith.constant 0 : index
    %29 = vector.load %arg13[%c0_19, %c0_20, %c0_21] : memref<4x8x8xbf16, #tpu.memory_space<vmem>>, vector<4x8x8xbf16>
    "tpu.trace_start"() <{level = 10 : i32, message = "hqd,hkd->hqk"}> : () -> ()
    %cst_22 = arith.constant dense<0.000000e+00> : vector<4x8x8xf32>
    %30 = tpu.matmul %28, %29, %cst_22 {dimension_numbers = #tpu.dot_dimension_numbers<[2], [2], [1], [1], [0, 0, 0, 1, 1, 1], [0], [0]>} : vector<4x8x8xbf16>, vector<4x8x8xbf16>, vector<4x8x8xf32> -> vector<4x8x8xf32>
    "tpu.trace_stop"() : () -> ()
    %cst_23 = arith.constant dense<0xFF800000> : vector<4x8xf32>
    %31 = vector.multi_reduction <maximumf>, %30, %cst_23 [2] : vector<4x8x8xf32> to vector<4x8xf32>
    %32 = vector.shape_cast %31 : vector<4x8xf32> to vector<4x8x1xf32>
    %33 = vector.broadcast %32 : vector<4x8x1xf32> to vector<4x8x8xf32>
    %34 = arith.subf %30, %33 : vector<4x8x8xf32>
    %35 = math.exp %34 : vector<4x8x8xf32>
    %cst_24 = arith.constant dense<0.000000e+00> : vector<4x8xf32>
    %36 = vector.multi_reduction <add>, %35, %cst_24 [2] : vector<4x8x8xf32> to vector<4x8xf32>
    %37 = vector.shape_cast %36 : vector<4x8xf32> to vector<4x8x1xf32>
    %38 = tpu.reciprocal %37 {approx = true} : vector<4x8x1xf32> -> vector<4x8x1xf32>
    %39 = vector.broadcast %38 : vector<4x8x1xf32> to vector<4x8x8xf32>
    %40 = arith.mulf %35, %39 : vector<4x8x8xf32>
    %41 = arith.truncf %40 : vector<4x8x8xf32> to vector<4x8x8xbf16>
    %c0_25 = arith.constant 0 : index
    %c0_26 = arith.constant 0 : index
    %c0_27 = arith.constant 0 : index
    %42 = vector.load %arg14[%c0_25, %c0_26, %c0_27] : memref<4x8x8xbf16, #tpu.memory_space<vmem>>, vector<4x8x8xbf16>
    "tpu.trace_start"() <{level = 10 : i32, message = "hqk,hkd->hqd"}> : () -> ()
    %cst_28 = arith.constant dense<0.000000e+00> : vector<4x8x8xf32>
    %43 = tpu.matmul %41, %42, %cst_28 {dimension_numbers = #tpu.dot_dimension_numbers<[2], [1], [1], [2], [0, 0, 0, 1, 1, 2], [0], [0]>} : vector<4x8x8xbf16>, vector<4x8x8xbf16>, vector<4x8x8xf32> -> vector<4x8x8xf32>
    "tpu.trace_stop"() : () -> ()
    %44 = arith.truncf %43 : vector<4x8x8xf32> to vector<4x8x8xbf16>
    %45 = vector.extract_strided_slice %44 {offsets = [0, 0, 0], sizes = [1, 8, 8], strides = [1, 1, 1]} : vector<4x8x8xbf16> to vector<1x8x8xbf16>
    %46 = vector.shape_cast %45 : vector<1x8x8xbf16> to vector<8x8xbf16>
    %c0_29 = arith.constant 0 : index
    %c0_30 = arith.constant 0 : index
    %47 = vector.load %arg16[%c0_29, %c0_30] : memref<8x32xbf16, #tpu.memory_space<vmem>>, vector<8x8xbf16>
    tpu.vector_store %arg16[%c0_29, %c0_30], %46 {strides = array<i32>} : memref<8x32xbf16, #tpu.memory_space<vmem>>, vector<8x8xbf16>,
    %48 = vector.extract_strided_slice %44 {offsets = [1, 0, 0], sizes = [1, 8, 8], strides = [1, 1, 1]} : vector<4x8x8xbf16> to vector<1x8x8xbf16>
    %49 = vector.shape_cast %48 : vector<1x8x8xbf16> to vector<8x8xbf16>
    %c0_31 = arith.constant 0 : index
    %c8 = arith.constant 8 : index
    %50 = vector.load %arg16[%c0_31, %c8] : memref<8x32xbf16, #tpu.memory_space<vmem>>, vector<8x8xbf16>
    tpu.vector_store %arg16[%c0_31, %c8], %49 {strides = array<i32>} : memref<8x32xbf16, #tpu.memory_space<vmem>>, vector<8x8xbf16>,
    %51 = vector.extract_strided_slice %44 {offsets = [2, 0, 0], sizes = [1, 8, 8], strides = [1, 1, 1]} : vector<4x8x8xbf16> to vector<1x8x8xbf16>
    %52 = vector.shape_cast %51 : vector<1x8x8xbf16> to vector<8x8xbf16>
    %c0_32 = arith.constant 0 : index
    %c16 = arith.constant 16 : index
    %53 = vector.load %arg16[%c0_32, %c16] : memref<8x32xbf16, #tpu.memory_space<vmem>>, vector<8x8xbf16>
    tpu.vector_store %arg16[%c0_32, %c16], %52 {strides = array<i32>} : memref<8x32xbf16, #tpu.memory_space<vmem>>, vector<8x8xbf16>,
    %54 = vector.extract_strided_slice %44 {offsets = [3, 0, 0], sizes = [1, 8, 8], strides = [1, 1, 1]} : vector<4x8x8xbf16> to vector<1x8x8xbf16>
    %55 = vector.shape_cast %54 : vector<1x8x8xbf16> to vector<8x8xbf16>
    %c0_33 = arith.constant 0 : index
    %c24 = arith.constant 24 : index
    %56 = vector.load %arg16[%c0_33, %c24] : memref<8x32xbf16, #tpu.memory_space<vmem>>, vector<8x8xbf16>
    tpu.vector_store %arg16[%c0_33, %c24], %55 {strides = array<i32>} : memref<8x32xbf16, #tpu.memory_space<vmem>>, vector<8x8xbf16>,
    %c0_34 = arith.constant 0 : index
    %c0_35 = arith.constant 0 : index
    %57 = vector.load %arg16[%c0_34, %c0_35] : memref<8x32xbf16, #tpu.memory_space<vmem>>, vector<8x32xbf16>
    %c0_36 = arith.constant 0 : index
    %c0_37 = arith.constant 0 : index
    %58 = vector.load %arg10[%c0_36, %c0_37] : memref<32x32xbf16, #tpu.memory_space<vmem>>, vector<32x32xbf16>
    %cst_38 = arith.constant dense<0.000000e+00> : vector<8x32xf32>
    %59 = tpu.matmul %57, %58, %cst_38 {dimension_numbers = #tpu.dot_dimension_numbers<[1], [0], [0], [1], [0, 0, 1, 1], [], []>} : vector<8x32xbf16>, vector<32x32xbf16>, vector<8x32xf32> -> vector<8x32xf32>
    %c0_39 = arith.constant 0 : index
    %c0_40 = arith.constant 0 : index
    %60 = vector.load %arg11[%c0_39, %c0_40] : memref<1x32xf32, #tpu.memory_space<vmem>>, vector<1x32xf32>
    %61 = vector.broadcast %60 : vector<1x32xf32> to vector<8x32xf32>
    %62 = arith.addf %59, %61 : vector<8x32xf32>
    %c0_41 = arith.constant 0 : index
    %c0_42 = arith.constant 0 : index
    %c0_43 = arith.constant 0 : index
    %63 = vector.load %arg12[%c0_41, %c0_42, %c0_43] : memref<1x8x32xf32, #tpu.memory_space<vmem>>, vector<1x8x32xf32>
    %64 = vector.shape_cast %63 : vector<1x8x32xf32> to vector<8x32xf32>
    %65 = vector.shape_cast %62 : vector<8x32xf32> to vector<1x8x32xf32>
    tpu.vector_store %arg12[%c0_41, %c0_42, %c0_43], %65 {strides = array<i32>} : memref<1x8x32xf32, #tpu.memory_space<vmem>>, vector<1x8x32xf32>,
    return
  }
  func.func @transform_0(%arg0: i32, %arg1: i32) -> (i32, i32, i32) {
    %c0_i32 = arith.constant 0 : i32
    %c0_i32_0 = arith.constant 0 : i32
    return %arg0, %arg1, %c0_i32 : i32, i32, i32
  }
  func.func @transform_1(%arg0: i32, %arg1: i32) -> (i32, i32, i32) {
    %c0_i32 = arith.constant 0 : i32
    %c0_i32_0 = arith.constant 0 : i32
    %c0_i32_1 = arith.constant 0 : i32
    return %arg0, %c0_i32, %c0_i32_0 : i32, i32, i32
  }
  func.func @transform_2(%arg0: i32, %arg1: i32) -> (i32, i32) {
    %c0_i32 = arith.constant 0 : i32
    %c0_i32_0 = arith.constant 0 : i32
    %c0_i32_1 = arith.constant 0 : i32
    return %c0_i32, %c0_i32_0 : i32, i32
  }
  func.func @transform_3(%arg0: i32, %arg1: i32) -> (i32, i32) {
    %c0_i32 = arith.constant 0 : i32
    %c0_i32_0 = arith.constant 0 : i32
    %c0_i32_1 = arith.constant 0 : i32
    return %c0_i32, %c0_i32_0 : i32, i32
  }
  func.func @transform_4(%arg0: i32, %arg1: i32) -> (i32, i32) {
    %c0_i32 = arith.constant 0 : i32
    %c0_i32_0 = arith.constant 0 : i32
    %c0_i32_1 = arith.constant 0 : i32
    return %c0_i32, %c0_i32_0 : i32, i32
  }
  func.func @transform_5(%arg0: i32, %arg1: i32) -> (i32, i32) {
    %c0_i32 = arith.constant 0 : i32
    %c0_i32_0 = arith.constant 0 : i32
    %c0_i32_1 = arith.constant 0 : i32
    return %c0_i32, %c0_i32_0 : i32, i32
  }
  func.func @transform_6(%arg0: i32, %arg1: i32) -> (i32, i32) {
    %c0_i32 = arith.constant 0 : i32
    %c0_i32_0 = arith.constant 0 : i32
    %c0_i32_1 = arith.constant 0 : i32
    return %c0_i32, %c0_i32_0 : i32, i32
  }
  func.func @transform_7(%arg0: i32, %arg1: i32) -> (i32, i32) {
    %c0_i32 = arith.constant 0 : i32
    %c0_i32_0 = arith.constant 0 : i32
    %c0_i32_1 = arith.constant 0 : i32
    return %c0_i32, %c0_i32_0 : i32, i32
  }
  func.func @transform_8(%arg0: i32, %arg1: i32) -> (i32, i32) {
    %c0_i32 = arith.constant 0 : i32
    %c0_i32_0 = arith.constant 0 : i32
    %c0_i32_1 = arith.constant 0 : i32
    return %c0_i32, %c0_i32_0 : i32, i32
  }
  func.func @transform_9(%arg0: i32, %arg1: i32) -> (i32, i32) {
    %c0_i32 = arith.constant 0 : i32
    %c0_i32_0 = arith.constant 0 : i32
    %c0_i32_1 = arith.constant 0 : i32
    return %c0_i32, %c0_i32_0 : i32, i32
  }
  func.func @transform_10(%arg0: i32, %arg1: i32) -> (i32, i32, i32) {
    %c0_i32 = arith.constant 0 : i32
    %c0_i32_0 = arith.constant 0 : i32
    return %arg0, %arg1, %c0_i32 : i32, i32, i32
  }
}

</mosaic_0001>

<llo_original>
// kernel: tpu_custom_call.1
$region0: #{tpu_custom_call.1}
  #allocation0 [shape = 'u32[]', space=smem, size = 0x4, offset = 0x4, fixed_abs, tag = 'smem constant byte address 0x4 - core index']
  #allocation1 [shape = 'u32[72,128]{1,0:T(1,128)}', space=vmem, size = 0x9000, scoped, tag = 'internal scratch']
  #allocation2 [shape = 'bf16[4,8,8]{2,1,0:T(8,128)(2,1)}', space=vmem, size = 0x2000, scoped, tag = 'scratch operand']
  #allocation3 [shape = 'bf16[4,8,8]{2,1,0:T(8,128)(2,1)}', space=vmem, size = 0x2000, scoped, tag = 'scratch operand']
  #allocation4 [shape = 'bf16[4,8,8]{2,1,0:T(8,128)(2,1)}', space=vmem, size = 0x2000, scoped, tag = 'scratch operand']
  #allocation5 [shape = 'bf16[8,32]{1,0:T(8,128)(2,1)}', space=vmem, size = 0x800, scoped, tag = 'scratch operand']
  %s0 = inlined_call_operand.hbm [shape: f32[2,16,32], index: 0, kind: input, shape index: {}]
  %s1 = inlined_call_operand.hbm [shape: f32[2,8,24], index: 1, kind: input, shape index: {}]
  %s2 = inlined_call_operand.hbm [shape: bf16[32,32], index: 2, kind: input, shape index: {}]
  %s3 = inlined_call_operand.vmem [shape: f32[1,32], index: 3, kind: input, shape index: {}]
  %s4 = inlined_call_operand.hbm [shape: bf16[24,32], index: 4, kind: input, shape index: {}]
  %s5 = inlined_call_operand.vmem [shape: f32[1,32], index: 5, kind: input, shape index: {}]
  %s6 = inlined_call_operand.hbm [shape: bf16[24,32], index: 6, kind: input, shape index: {}]
  %s7 = inlined_call_operand.vmem [shape: f32[1,32], index: 7, kind: input, shape index: {}]
  %s8 = inlined_call_operand.hbm [shape: bf16[32,32], index: 8, kind: input, shape index: {}]
  %s9 = inlined_call_operand.vmem [shape: f32[1,32], index: 9, kind: input, shape index: {}]
  %s10 = inlined_call_operand.hbm [shape: f32[2,16,32], index: 10, kind: output, shape index: {}]
  %s11 = sld [smem:[#allocation0]]
  $region101: #{tpu_custom_call.1} parent=0
    _
  %s13 = ssub.s32 1, %s11
  %s14 = scalar_select 0, %s13, %s11
  $region1: #{tpu_custom_call.1} parent=0
    #allocation6 [shape = 'u8[8192]{0}', space=vmem, size = 0x2000, scoped, tag = 'input window, operand 0']
    #allocation7 [shape = 's32[2]{0}', space=sflag, size = 0x8, scoped, tag = 'scoped memory for tpu_custom_call.1']
    #allocation8 [shape = 's32[2]{0}', space=sflag, size = 0x8, scoped, tag = 'scoped memory for tpu_custom_call.1']
    #allocation9 [shape = 'u8[8192]{0}', space=vmem, size = 0x2000, scoped, tag = 'input window, operand 1']
    #allocation10 [shape = 's32[2]{0}', space=sflag, size = 0x8, scoped, tag = 'scoped memory for tpu_custom_call.1']
    #allocation11 [shape = 'u8[8192]{0}', space=vmem, size = 0x2000, scoped, tag = 'input window, operand 2, single buffered']
    #allocation12 [shape = 'u8[6144]{0}', space=vmem, size = 0x1800, scoped, tag = 'input window, operand 4, single buffered']
    #allocation13 [shape = 's32[1]{0}', space=sflag, size = 0x4, scoped, tag = 'scoped memory for tpu_custom_call.1']
    #allocation14 [shape = 'u8[6144]{0}', space=vmem, size = 0x1800, scoped, tag = 'input window, operand 6, single buffered']
    #allocation15 [shape = 'u8[8192]{0}', space=vmem, size = 0x2000, scoped, tag = 'input window, operand 8, single buffered']
    #allocation16 [shape = 's32[1]{0}', space=sflag, size = 0x4, scoped, tag = 'scoped memory for tpu_custom_call.1']
    #allocation17 [shape = 'u8[8192]{0}', space=vmem, size = 0x2000, scoped, tag = 'output window, operand 0']
    %15 = vsyncpa [#allocation7], 0
    %s16 = scalar_lea.sflag [#allocation7], 1
    %17 = vsyncpa %s16, 0
    %18 = vsyncpa [#allocation10], 0
    %s19 = scalar_lea.sflag [#allocation10], 1
    %20 = vsyncpa %s19, 0
    %21 = vsyncpa [#allocation13], 0
    %22 = vsyncpa [#allocation16], 0
    %23 = vsyncpa [#allocation8], 0
    %s24 = scalar_lea.sflag [#allocation8], 1
    %25 = vsyncpa %s24, 0
    loop: start=0, step=1, limit=6
    $region2: #{tpu_custom_call.1} parent=1 // loop_pre_header
      _
    $region3: #{tpu_custom_call.1} parent=1 // loop_header
      %s27 = sphi 0, %s31
      %p28 = scmp.ge.s32.totalorder %s27, 6
      %s34 = sphi 0, %s46
      %s35 = sphi 0, %s42
      %s36 = sphi 0, %s34
      %s37 = sphi 0, %s35
      %s38 = sphi 0, %s36
      %s39 = sphi 0, %s37
      %s51 = sphi 0, %s53
      %s54 = sphi 0, %s51
      %s55 = sphi 0, %s54
      %s71 = sphi 0, %s55
      %s77 = sphi 0, %s79
      %s80 = sphi 0, %s77
      %s81 = sphi 0, %s80
      %s97 = sphi 0, %s81
      %s101 = sphi 0, %s101
      %s103 = sphi 0, %s101
      %s104 = sphi 0, %s103
      %s118 = sphi 0, %s104
      %s122 = sphi 0, %s122
      %s124 = sphi 0, %s122
      %s125 = sphi 0, %s124
      %s139 = sphi 0, %s125
      %s143 = sphi 0, %s143
      %s145 = sphi 0, %s143
      %s146 = sphi 0, %s145
      %s160 = sphi 0, %s146
      %s164 = sphi 0, %s164
      %s166 = sphi 0, %s164
      %s167 = sphi 0, %s166
      %s181 = sphi 0, %s167
      %s185 = sphi 0, %s185
      %s187 = sphi 0, %s185
      %s188 = sphi 0, %s187
      %s202 = sphi 0, %s188
      %s206 = sphi 0, %s206
      %s208 = sphi 0, %s206
      %s209 = sphi 0, %s208
      %s223 = sphi 0, %s209
      %s227 = sphi 0, %s227
      %s229 = sphi 0, %s227
      %s230 = sphi 0, %s229
      %s244 = sphi 0, %s230
      %s248 = sphi 0, %s248
      %s250 = sphi 0, %s248
      %s251 = sphi 0, %s250
      %s265 = sphi 0, %s251
      %s273 = sphi 0, %s275
      %s276 = sphi 0, %s273
      %s277 = sphi 0, %s276
      %s293 = sphi 0, %s277
    $region4: #{tpu_custom_call.1} parent=1 // loop_header_branch
      %30 = sbr.rel (%p28) target = $region8
    $region5: #{tpu_custom_call.1} parent=1 // loop_body
      %s32 = ssub.s32 %s27, 1
      %s33 = ssub.s32 %s27, 2
      %s40 = sadd.s32 1, %s35
      %p41 = scmp.ge.s32.totalorder %s40, 2
      %s42 = scalar_select %p41, 0, %s40
      %s43 = sadd.s32 1, %s34
      %s44 = scalar_select %p41, %s43, %s34
      %p45 = scmp.ge.s32.totalorder %s44, 2
      %s46 = scalar_select %p45, 0, %s44
      %s47 = ssub.s32 %s34, %s46
      %s48 = ssub.s32 %s35, %s42
      %s49 = sor.u32 %s47, %s48
      %p50 = scmp.eq.s32.totalorder %s49, 0
      %s52 = sadd.s32 %s51, 1
      %s53 = scalar_select %p50, %s51, %s52
      %p56 = pneg %p50
      %p57 = scmp.eq.s32.totalorder %s27, 3
      %p58 = por %p56, %p57
      %p59 = scmp.ne.s32.totalorder %s51, %s54
      %p60 = scmp.eq.s32.totalorder %s27, 0
      %p61 = por %p59, %p60
      %p62 = scmp.ne.s32.totalorder %s51, %s54
      %p63 = scmp.eq.s32.totalorder %s32, 3
      %p64 = por %p62, %p63
      %p65 = scmp.ne.s32.totalorder %s54, %s55
      %p66 = scmp.eq.s32.totalorder %s32, 0
      %p67 = por %p65, %p66
      %p68 = scmp.ne.s32.totalorder %s54, %s55
      %p69 = scmp.eq.s32.totalorder %s33, 3
      %p70 = por %p68, %p69
      %p72 = scmp.ne.s32.totalorder %s55, %s71
      %p73 = scmp.eq.s32.totalorder %s33, 0
      %p74 = por %p72, %p73
      %s75 = ssub.s32 %s34, %s46
      %p76 = scmp.eq.s32.totalorder %s75, 0
      %s78 = sadd.s32 %s77, 1
      %s79 = scalar_select %p76, %s77, %s78
      %p82 = pneg %p76
      %p83 = scmp.eq.s32.totalorder %s27, 3
      %p84 = por %p82, %p83
      %p85 = scmp.ne.s32.totalorder %s77, %s80
      %p86 = scmp.eq.s32.totalorder %s27, 0
      %p87 = por %p85, %p86
      %p88 = scmp.ne.s32.totalorder %s77, %s80
      %p89 = scmp.eq.s32.totalorder %s32, 3
      %p90 = por %p88, %p89
      %p91 = scmp.ne.s32.totalorder %s80, %s81
      %p92 = scmp.eq.s32.totalorder %s32, 0
      %p93 = por %p91, %p92
      %p94 = scmp.ne.s32.totalorder %s80, %s81
      %p95 = scmp.eq.s32.totalorder %s33, 3
      %p96 = por %p94, %p95
      %p98 = scmp.ne.s32.totalorder %s81, %s97
      %p99 = scmp.eq.s32.totalorder %s33, 0
      %p100 = por %p98, %p99
      %s102 = sadd.s32 %s101, 1
      %p105 = scmp.eq.s32.totalorder %s27, 3
      %p106 = scmp.ne.s32.totalorder %s101, %s103
      %p107 = scmp.eq.s32.totalorder %s27, 0
      %p108 = por %p106, %p107
      %p109 = scmp.ne.s32.totalorder %s101, %s103
      %p110 = scmp.eq.s32.totalorder %s32, 3
      %p111 = por %p109, %p110
      %p112 = scmp.ne.s32.totalorder %s103, %s104
      %p113 = scmp.eq.s32.totalorder %s32, 0
      %p114 = por %p112, %p113
      %p115 = scmp.ne.s32.totalorder %s103, %s104
      %p116 = scmp.eq.s32.totalorder %s33, 3
      %p117 = por %p115, %p116
      %p119 = scmp.ne.s32.totalorder %s104, %s118
      %p120 = scmp.eq.s32.totalorder %s33, 0
      %p121 = por %p119, %p120
      %s123 = sadd.s32 %s122, 1
      %p126 = scmp.eq.s32.totalorder %s27, 3
      %p127 = scmp.ne.s32.totalorder %s122, %s124
      %p128 = scmp.eq.s32.totalorder %s27, 0
      %p129 = por %p127, %p128
      %p130 = scmp.ne.s32.totalorder %s122, %s124
      %p131 = scmp.eq.s32.totalorder %s32, 3
      %p132 = por %p130, %p131
      %p133 = scmp.ne.s32.totalorder %s124, %s125
      %p134 = scmp.eq.s32.totalorder %s32, 0
      %p135 = por %p133, %p134
      %p136 = scmp.ne.s32.totalorder %s124, %s125
      %p137 = scmp.eq.s32.totalorder %s33, 3
      %p138 = por %p136, %p137
      %p140 = scmp.ne.s32.totalorder %s125, %s139
      %p141 = scmp.eq.s32.totalorder %s33, 0
      %p142 = por %p140, %p141
      %s144 = sadd.s32 %s143, 1
      %p147 = scmp.eq.s32.totalorder %s27, 3
      %p148 = scmp.ne.s32.totalorder %s143, %s145
      %p149 = scmp.eq.s32.totalorder %s27, 0
      %p150 = por %p148, %p149
      %p151 = scmp.ne.s32.totalorder %s143, %s145
      %p152 = scmp.eq.s32.totalorder %s32, 3
      %p153 = por %p151, %p152
      %p154 = scmp.ne.s32.totalorder %s145, %s146
      %p155 = scmp.eq.s32.totalorder %s32, 0
      %p156 = por %p154, %p155
      %p157 = scmp.ne.s32.totalorder %s145, %s146
      %p158 = scmp.eq.s32.totalorder %s33, 3
      %p159 = por %p157, %p158
      %p161 = scmp.ne.s32.totalorder %s146, %s160
      %p162 = scmp.eq.s32.totalorder %s33, 0
      %p163 = por %p161, %p162
      %s165 = sadd.s32 %s164, 1
      %p168 = scmp.eq.s32.totalorder %s27, 3
      %p169 = scmp.ne.s32.totalorder %s164, %s166
      %p170 = scmp.eq.s32.totalorder %s27, 0
      %p171 = por %p169, %p170
      %p172 = scmp.ne.s32.totalorder %s164, %s166
      %p173 = scmp.eq.s32.totalorder %s32, 3
      %p174 = por %p172, %p173
      %p175 = scmp.ne.s32.totalorder %s166, %s167
      %p176 = scmp.eq.s32.totalorder %s32, 0
      %p177 = por %p175, %p176
      %p178 = scmp.ne.s32.totalorder %s166, %s167
      %p179 = scmp.eq.s32.totalorder %s33, 3
      %p180 = por %p178, %p179
      %p182 = scmp.ne.s32.totalorder %s167, %s181
      %p183 = scmp.eq.s32.totalorder %s33, 0
      %p184 = por %p182, %p183
      %s186 = sadd.s32 %s185, 1
      %p189 = scmp.eq.s32.totalorder %s27, 3
      %p190 = scmp.ne.s32.totalorder %s185, %s187
      %p191 = scmp.eq.s32.totalorder %s27, 0
      %p192 = por %p190, %p191
      %p193 = scmp.ne.s32.totalorder %s185, %s187
      %p194 = scmp.eq.s32.totalorder %s32, 3
      %p195 = por %p193, %p194
      %p196 = scmp.ne.s32.totalorder %s187, %s188
      %p197 = scmp.eq.s32.totalorder %s32, 0
      %p198 = por %p196, %p197
      %p199 = scmp.ne.s32.totalorder %s187, %s188
      %p200 = scmp.eq.s32.totalorder %s33, 3
      %p201 = por %p199, %p200
      %p203 = scmp.ne.s32.totalorder %s188, %s202
      %p204 = scmp.eq.s32.totalorder %s33, 0
      %p205 = por %p203, %p204
      %s207 = sadd.s32 %s206, 1
      %p210 = scmp.eq.s32.totalorder %s27, 3
      %p211 = scmp.ne.s32.totalorder %s206, %s208
      %p212 = scmp.eq.s32.totalorder %s27, 0
      %p213 = por %p211, %p212
      %p214 = scmp.ne.s32.totalorder %s206, %s208
      %p215 = scmp.eq.s32.totalorder %s32, 3
      %p216 = por %p214, %p215
      %p217 = scmp.ne.s32.totalorder %s208, %s209
      %p218 = scmp.eq.s32.totalorder %s32, 0
      %p219 = por %p217, %p218
      %p220 = scmp.ne.s32.totalorder %s208, %s209
      %p221 = scmp.eq.s32.totalorder %s33, 3
      %p222 = por %p220, %p221
      %p224 = scmp.ne.s32.totalorder %s209, %s223
      %p225 = scmp.eq.s32.totalorder %s33, 0
      %p226 = por %p224, %p225
      %s228 = sadd.s32 %s227, 1
      %p231 = scmp.eq.s32.totalorder %s27, 3
      %p232 = scmp.ne.s32.totalorder %s227, %s229
      %p233 = scmp.eq.s32.totalorder %s27, 0
      %p234 = por %p232, %p233
      %p235 = scmp.ne.s32.totalorder %s227, %s229
      %p236 = scmp.eq.s32.totalorder %s32, 3
      %p237 = por %p235, %p236
      %p238 = scmp.ne.s32.totalorder %s229, %s230
      %p239 = scmp.eq.s32.totalorder %s32, 0
      %p240 = por %p238, %p239
      %p241 = scmp.ne.s32.totalorder %s229, %s230
      %p242 = scmp.eq.s32.totalorder %s33, 3
      %p243 = por %p241, %p242
      %p245 = scmp.ne.s32.totalorder %s230, %s244
      %p246 = scmp.eq.s32.totalorder %s33, 0
      %p247 = por %p245, %p246
      %s249 = sadd.s32 %s248, 1
      %p252 = scmp.eq.s32.totalorder %s27, 3
      %p253 = scmp.ne.s32.totalorder %s248, %s250
      %p254 = scmp.eq.s32.totalorder %s27, 0
      %p255 = por %p253, %p254
      %p256 = scmp.ne.s32.totalorder %s248, %s250
      %p257 = scmp.eq.s32.totalorder %s32, 3
      %p258 = por %p256, %p257
      %p259 = scmp.ne.s32.totalorder %s250, %s251
      %p260 = scmp.eq.s32.totalorder %s32, 0
      %p261 = por %p259, %p260
      %p262 = scmp.ne.s32.totalorder %s250, %s251
      %p263 = scmp.eq.s32.totalorder %s33, 3
      %p264 = por %p262, %p263
      %p266 = scmp.ne.s32.totalorder %s251, %s265
      %p267 = scmp.eq.s32.totalorder %s33, 0
      %p268 = por %p266, %p267
      %s269 = ssub.s32 %s34, %s46
      %s270 = ssub.s32 %s35, %s42
      %s271 = sor.u32 %s269, %s270
      %p272 = scmp.eq.s32.totalorder %s271, 0
      %s274 = sadd.s32 %s273, 1
      %s275 = scalar_select %p272, %s273, %s274
      %p278 = pneg %p272
      %p279 = scmp.eq.s32.totalorder %s27, 3
      %p280 = por %p278, %p279
      %p281 = scmp.ne.s32.totalorder %s273, %s276
      %p282 = scmp.eq.s32.totalorder %s27, 0
      %p283 = por %p281, %p282
      %p284 = scmp.ne.s32.totalorder %s273, %s276
      %p285 = scmp.eq.s32.totalorder %s32, 3
      %p286 = por %p284, %p285
      %p287 = scmp.ne.s32.totalorder %s276, %s277
      %p288 = scmp.eq.s32.totalorder %s32, 0
      %p289 = por %p287, %p288
      %p290 = scmp.ne.s32.totalorder %s276, %s277
      %p291 = scmp.eq.s32.totalorder %s33, 3
      %p292 = por %p290, %p291
      %p294 = scmp.ne.s32.totalorder %s277, %s293
      %p295 = scmp.eq.s32.totalorder %s33, 0
      %p296 = por %p294, %p295
      %p297 = scmp.le.s32.totalorder 1, %s27
      %p298 = scmp.lt.s32.totalorder %s27, 5
      %p299 = pnand %p297, %p298
      %p300 = pneg %p299
      // Predicated region
      $region9: #{tpu_custom_call.1} parent=5 // pred_check
        _
      $region10: #{tpu_custom_call.1} parent=5 // pred_check_branch
        %302 = sbr.rel (%p299) target = $region12
      $region11: #{tpu_custom_call.1} parent=5 // pred_region
        %s303 = ssub.s32 %s27, 1
        // Predicated region
        $region13: #{tpu_custom_call.1} parent=11 // pred_check
          %p304 = pneg %p114
        $region14: #{tpu_custom_call.1} parent=11 // pred_check_branch
          %306 = sbr.rel (%p304) target = $region16
        $region15: #{tpu_custom_call.1} parent=11 // pred_region
          %308 = vsyncadd [#allocation10], 0
          %s309 = sshll.u32 %s2, 4
          %s310 = int_to_ptr.hbm [resolvable:$true] %s309
          %s311 = sshll.u32 [#allocation11], 4
          %s312 = int_to_ptr.vmem [resolvable:$true] %s311
          %317 = dma.hbm_to_vmem [thread:$0]  %s310, 256, %s312, [#allocation10], 64, 64, 4
        $region16: #{tpu_custom_call.1} parent=11 // pred_fallthru
          _
        // Predicated region
        $region17: #{tpu_custom_call.1} parent=11 // pred_check
          %p318 = pneg %p135
        $region18: #{tpu_custom_call.1} parent=11 // pred_check_branch
          %320 = sbr.rel (%p318) target = $region20
        $region19: #{tpu_custom_call.1} parent=11 // pred_region
          _
        $region20: #{tpu_custom_call.1} parent=11 // pred_fallthru
          _
        // Predicated region
        $region21: #{tpu_custom_call.1} parent=11 // pred_check
          %p321 = pneg %p156
        $region22: #{tpu_custom_call.1} parent=11 // pred_check_branch
          %323 = sbr.rel (%p321) target = $region24
        $region23: #{tpu_custom_call.1} parent=11 // pred_region
          %325 = vsyncadd [#allocation13], 0
          %s326 = sshll.u32 %s4, 4
          %s327 = int_to_ptr.hbm [resolvable:$true] %s326
          %s328 = sshll.u32 [#allocation12], 4
          %s329 = int_to_ptr.vmem [resolvable:$true] %s328
          %334 = dma.hbm_to_vmem [thread:$0]  %s327, 192, %s329, [#allocation13], 64, 64, 4
        $region24: #{tpu_custom_call.1} parent=11 // pred_fallthru
          _
        // Predicated region
        $region25: #{tpu_custom_call.1} parent=11 // pred_check
          %p335 = pneg %p177
        $region26: #{tpu_custom_call.1} parent=11 // pred_check_branch
          %337 = sbr.rel (%p335) target = $region28
        $region27: #{tpu_custom_call.1} parent=11 // pred_region
          _
        $region28: #{tpu_custom_call.1} parent=11 // pred_fallthru
          _
        // Predicated region
        $region29: #{tpu_custom_call.1} parent=11 // pred_check
          %p338 = pneg %p198
        $region30: #{tpu_custom_call.1} parent=11 // pred_check_branch
          %340 = sbr.rel (%p338) target = $region32
        $region31: #{tpu_custom_call.1} parent=11 // pred_region
          %342 = vsyncadd [#allocation13], 0
          %s343 = sshll.u32 %s6, 4
          %s344 = int_to_ptr.hbm [resolvable:$true] %s343
          %s345 = sshll.u32 [#allocation14], 4
          %s346 = int_to_ptr.vmem [resolvable:$true] %s345
          %351 = dma.hbm_to_vmem [thread:$0]  %s344, 192, %s346, [#allocation13], 64, 64, 4
        $region32: #{tpu_custom_call.1} parent=11 // pred_fallthru
          _
        // Predicated region
        $region33: #{tpu_custom_call.1} parent=11 // pred_check
          %p352 = pneg %p219
        $region34: #{tpu_custom_call.1} parent=11 // pred_check_branch
          %354 = sbr.rel (%p352) target = $region36
        $region35: #{tpu_custom_call.1} parent=11 // pred_region
          _
        $region36: #{tpu_custom_call.1} parent=11 // pred_fallthru
          _
        // Predicated region
        $region37: #{tpu_custom_call.1} parent=11 // pred_check
          %p355 = pneg %p240
        $region38: #{tpu_custom_call.1} parent=11 // pred_check_branch
          %357 = sbr.rel (%p355) target = $region40
        $region39: #{tpu_custom_call.1} parent=11 // pred_region
          %359 = vsyncadd [#allocation16], 0
          %s360 = sshll.u32 %s8, 4
          %s361 = int_to_ptr.hbm [resolvable:$true] %s360
          %s362 = sshll.u32 [#allocation15], 4
          %s363 = int_to_ptr.vmem [resolvable:$true] %s362
          %368 = dma.hbm_to_vmem [thread:$0]  %s361, 256, %s363, [#allocation16], 64, 64, 4
        $region40: #{tpu_custom_call.1} parent=11 // pred_fallthru
          _
        // Predicated region
        $region41: #{tpu_custom_call.1} parent=11 // pred_check
          %p369 = pneg %p261
        $region42: #{tpu_custom_call.1} parent=11 // pred_check_branch
          %371 = sbr.rel (%p369) target = $region44
        $region43: #{tpu_custom_call.1} parent=11 // pred_region
          _
        $region44: #{tpu_custom_call.1} parent=11 // pred_fallthru
          _
      $region12: #{tpu_custom_call.1} parent=5 // pred_fallthru
        _
      %p372 = scmp.lt.s32.totalorder %s27, 4
      // Predicated region
      $region45: #{tpu_custom_call.1} parent=5 // pred_check
        %p373 = pneg %p372
      $region46: #{tpu_custom_call.1} parent=5 // pred_check_branch
        %375 = sbr.rel (%p373) target = $region48
      $region47: #{tpu_custom_call.1} parent=5 // pred_region
        // Predicated region
        $region49: #{tpu_custom_call.1} parent=47 // pred_check
          %p376 = pneg %p61
        $region50: #{tpu_custom_call.1} parent=47 // pred_check_branch
          %378 = sbr.rel (%p376) target = $region52
        $region51: #{tpu_custom_call.1} parent=47 // pred_region
          %s379 = sand.u32 %s51, 1
          %s380 = scalar_lea.sflag [#allocation7], %s379
          %s381 = sand.u32 %s51, 1
          %s382 = smul.addr %s381, 8
          %s383 = scalar_lea.vmem [#allocation6], %s382
          %385 = vsyncadd %s380, 0
          %s386 = smul.addr %s34, 2
          %s387 = sadd.s32 %s35, %s386
          %s388 = smul.addr %s387, 8
          %s389 = scalar_lea.hbm %s0, %s388
          %s391 = sshll.u32 %s389, 4
          %s392 = int_to_ptr.hbm [resolvable:$true] %s391
          %s393 = sshll.u32 %s383, 4
          %s394 = int_to_ptr.vmem [resolvable:$true] %s393
          %396 = dma.hbm_to_vmem [thread:$0]  %s392, 128, %s394, %s380
        $region52: #{tpu_custom_call.1} parent=47 // pred_fallthru
          _
        // Predicated region
        $region53: #{tpu_custom_call.1} parent=47 // pred_check
          %p397 = pneg %p87
        $region54: #{tpu_custom_call.1} parent=47 // pred_check_branch
          %399 = sbr.rel (%p397) target = $region56
        $region55: #{tpu_custom_call.1} parent=47 // pred_region
          %s400 = sand.u32 %s27, 1
          %s401 = scalar_lea.sflag [#allocation10], %s400
          %s402 = sand.u32 %s77, 1
          %s403 = smul.addr %s402, 8
          %s404 = scalar_lea.vmem [#allocation9], %s403
          %406 = vsyncadd %s401, 0
          %s407 = smul.addr %s34, 8
          %s408 = scalar_lea.hbm %s1, %s407
          %s410 = sshll.u32 %s408, 4
          %s411 = int_to_ptr.hbm [resolvable:$true] %s410
          %s412 = sshll.u32 %s404, 4
          %s413 = int_to_ptr.vmem [resolvable:$true] %s412
          %415 = dma.hbm_to_vmem [thread:$0]  %s411, 128, %s413, %s401
        $region56: #{tpu_custom_call.1} parent=47 // pred_fallthru
          _
      $region48: #{tpu_custom_call.1} parent=5 // pred_fallthru
        _
      %p416 = scmp.le.s32.totalorder 1, %s27
      %p417 = scmp.lt.s32.totalorder %s27, 5
      %p418 = pnand %p416, %p417
      %p419 = pneg %p418
      // Predicated region
      $region57: #{tpu_custom_call.1} parent=5 // pred_check
        _
      $region58: #{tpu_custom_call.1} parent=5 // pred_check_branch
        %421 = sbr.rel (%p418) target = $region60
      $region59: #{tpu_custom_call.1} parent=5 // pred_region
        %s422 = ssub.s32 %s27, 1
        %s423 = sand.u32 %s54, 1
        %s424 = scalar_lea.sflag [#allocation7], %s423
        %s425 = sand.u32 %s54, 1
        %s426 = smul.addr %s425, 8
        %s427 = scalar_lea.vmem [#allocation6], %s426
        // Predicated region
        $region61: #{tpu_custom_call.1} parent=59 // pred_check
          %p428 = pneg %p67
        $region62: #{tpu_custom_call.1} parent=59 // pred_check_branch
          %430 = sbr.rel (%p428) target = $region64
        $region63: #{tpu_custom_call.1} parent=59 // pred_region
          %432 = dma.done %s424, 128
        $region64: #{tpu_custom_call.1} parent=59 // pred_fallthru
          _
        %s433 = sand.u32 %s32, 1
        %s434 = scalar_lea.sflag [#allocation10], %s433
        %s435 = sand.u32 %s80, 1
        %s436 = smul.addr %s435, 8
        %s437 = scalar_lea.vmem [#allocation9], %s436
        // Predicated region
        $region65: #{tpu_custom_call.1} parent=59 // pred_check
          %p438 = pneg %p93
        $region66: #{tpu_custom_call.1} parent=59 // pred_check_branch
          %440 = sbr.rel (%p438) target = $region68
        $region67: #{tpu_custom_call.1} parent=59 // pred_region
          %442 = dma.done %s434, 128
        $region68: #{tpu_custom_call.1} parent=59 // pred_fallthru
          _
        // Predicated region
        $region69: #{tpu_custom_call.1} parent=59 // pred_check
          %p443 = pneg %p114
        $region70: #{tpu_custom_call.1} parent=59 // pred_check_branch
          %445 = sbr.rel (%p443) target = $region72
        $region71: #{tpu_custom_call.1} parent=59 // pred_region
          %447 = dma.done [#allocation10], 256
        $region72: #{tpu_custom_call.1} parent=59 // pred_fallthru
          _
        // Predicated region
        $region73: #{tpu_custom_call.1} parent=59 // pred_check
          %p448 = pneg %p156
        $region74: #{tpu_custom_call.1} parent=59 // pred_check_branch
          %450 = sbr.rel (%p448) target = $region76
        $region75: #{tpu_custom_call.1} parent=59 // pred_region
          %452 = dma.done [#allocation13], 192
        $region76: #{tpu_custom_call.1} parent=59 // pred_fallthru
          _
        // Predicated region
        $region77: #{tpu_custom_call.1} parent=59 // pred_check
          %p453 = pneg %p198
        $region78: #{tpu_custom_call.1} parent=59 // pred_check_branch
          %455 = sbr.rel (%p453) target = $region80
        $region79: #{tpu_custom_call.1} parent=59 // pred_region
          %457 = dma.done [#allocation13], 192
        $region80: #{tpu_custom_call.1} parent=59 // pred_fallthru
          _
        // Predicated region
        $region81: #{tpu_custom_call.1} parent=59 // pred_check
          %p458 = pneg %p240
        $region82: #{tpu_custom_call.1} parent=59 // pred_check_branch
          %460 = sbr.rel (%p458) target = $region84
        $region83: #{tpu_custom_call.1} parent=59 // pred_region
          %462 = dma.done [#allocation16], 256
        $region84: #{tpu_custom_call.1} parent=59 // pred_fallthru
          _
        %s463 = sand.u32 %s54, 1
        %s464 = scalar_lea.sflag [#allocation7], %s463
        %s465 = sand.u32 %s54, 1
        %s466 = smul.addr %s465, 8
        %s467 = scalar_lea.vmem [#allocation6], %s466
        %p468 = pneg %p67
        %p469 = pneg %p64
        %s470 = sand.u32 %s32, 1
        %s471 = scalar_lea.sflag [#allocation10], %s470
        %s472 = sand.u32 %s80, 1
        %s473 = smul.addr %s472, 8
        %s474 = scalar_lea.vmem [#allocation9], %s473
        %p475 = pneg %p93
        %p476 = pneg %p90
        %p477 = pneg %p114
        %p478 = pneg %p111
        %p479 = pneg %p135
        %p480 = pneg %p132
        %p481 = pneg %p156
        %p482 = pneg %p153
        %p483 = pneg %p177
        %p484 = pneg %p174
        %p485 = pneg %p198
        %p486 = pneg %p195
        %p487 = pneg %p219
        %p488 = pneg %p216
        %p489 = pneg %p240
        %p490 = pneg %p237
        %p491 = pneg %p261
        %p492 = pneg %p258
        %p493 = pneg %p289
        %p494 = pneg %p286
        %s495 = sand.u32 %s276, 1
        %s496 = scalar_lea.sflag [#allocation8], %s495
        %s497 = sand.u32 %s276, 1
        %s498 = smul.addr %s497, 8
        %s499 = scalar_lea.vmem [#allocation17], %s498
        %p501 = scmp.eq.s32.totalorder %s37, 0
        // Predicated region
        $region85: #{tpu_custom_call.1} parent=59 // pred_check
          %p502 = pneg %p501
        $region86: #{tpu_custom_call.1} parent=59 // pred_check_branch
          %504 = sbr.rel (%p502) target = $region88
        $region87: #{tpu_custom_call.1} parent=59 // pred_region
          %v505 = vld [vmem:[%s437] sm:$0xff]
          %v506 = vpack.c.bf16 %v505, %v505
          %v507 = vld [vmem:[#allocation12] sm:$0xf]
          %v508 = vld [vmem:[#allocation12 + $0x4] sm:$0xf]
          %v509 = vld [vmem:[#allocation12 + $0x8] sm:$0xf]
          %v510 = vld [vmem:[%s5] sm:$0x1]
          %v512 = vperm.slane %v510, 0
          %v517 = vunpack.c.l.b16 %v507
          %v518 = vunpack.c.l.b16 %v508
          %v519 = vunpack.c.l.b16 %v509
          %v520 = vpack.c.b16 %v518, %v517
          %v521 = vpack.c.b16 %v519, %v519
          %vm523 = vcmask 195584
          %v525 = vsel %vm523, %v506, 0
          %vm527 = vcmask 1043456
          %v529 = vsel %vm527, %v521, 0
          %531 = vmatpush.bf16.msra.mxu0 0
          %532 = vmatpush.bf16.msra.mxu0 0
          %533 = vmatpush.bf16.msra.mxu0 0
          %534 = vmatpush.bf16.msra.mxu0 0
          %535 = vmatpush.bf16.msra.mxu0 0
          %536 = vmatpush.bf16.msra.mxu0 0
          %537 = vmatpush.bf16.msra.mxu0 %v529
          %538 = vmatpush.bf16.msra.mxu0 %v520
          %539 = vmatmul.bf16.gmra.mxu0 %v525
          %v540 = vpop.f32.mrf.mxu0
          %v541 = vadd.f32 %v512, %v540
          %v542 = vpop.f32.mrf.mxu0
          %543 = vdwg.mxu0
          %v544 = vld [vmem:[#allocation14] sm:$0xf]
          %v545 = vld [vmem:[#allocation14 + $0x4] sm:$0xf]
          %v546 = vld [vmem:[#allocation14 + $0x8] sm:$0xf]
          %v547 = vld [vmem:[%s7] sm:$0x1]
          %v549 = vperm.slane %v547, 0
          %v554 = vunpack.c.l.b16 %v544
          %v555 = vunpack.c.l.b16 %v545
          %v556 = vunpack.c.l.b16 %v546
          %v557 = vpack.c.b16 %v555, %v554
          %v558 = vpack.c.b16 %v556, %v556
          %v561 = vsel %vm527, %v558, 0
          %563 = vmatpush.bf16.msra.mxu0 0
          %564 = vmatpush.bf16.msra.mxu0 0
          %565 = vmatpush.bf16.msra.mxu0 0
          %566 = vmatpush.bf16.msra.mxu0 0
          %567 = vmatpush.bf16.msra.mxu0 0
          %568 = vmatpush.bf16.msra.mxu0 0
          %569 = vmatpush.bf16.msra.mxu0 %v561
          %570 = vmatpush.bf16.msra.mxu0 %v557
          %571 = vmatmul.bf16.gmra.mxu0 %v525
          %v572 = vpop.f32.mrf.mxu0
          %v573 = vadd.f32 %v549, %v572
          %v574 = vpop.f32.mrf.mxu0
          %575 = vdwg.mxu0
          %v576 = vpack.c.bf16 %v541, %v541
          %v577 = vpack.c.bf16 %v573, %v573
          %vm578 = vcmask 60416
          %579 = vst.msk [vmem:[#allocation2] sm:$0xf] %vm578, %v576
          %580 = vst.msk [vmem:[#allocation3] sm:$0xf] %vm578, %v577
          %582 = vrot.lane.b32.xlu0 %v576, 120
          %v583 = vpop.permute.xlu0 %582
          %s585 = scalar_lea.vmem [#allocation2], 4
          %586 = vst.msk [vmem:[%s585] sm:$0xf] %vm578, %v583
          %588 = vrot.lane.b32.xlu0 %v577, 120
          %v589 = vpop.permute.xlu0 %588
          %s591 = scalar_lea.vmem [#allocation3], 4
          %592 = vst.msk [vmem:[%s591] sm:$0xf] %vm578, %v589
          %593 = vrot.lane.b32.xlu0 %v576, 112
          %v594 = vpop.permute.xlu0 %593
          %s596 = scalar_lea.vmem [#allocation2], 8
          %597 = vst.msk [vmem:[%s596] sm:$0xf] %vm578, %v594
          %598 = vrot.lane.b32.xlu0 %v577, 112
          %v599 = vpop.permute.xlu0 %598
          %s601 = scalar_lea.vmem [#allocation3], 8
          %602 = vst.msk [vmem:[%s601] sm:$0xf] %vm578, %v599
          %603 = vrot.lane.b32.xlu0 %v576, 104
          %v604 = vpop.permute.xlu0 %603
          %s606 = scalar_lea.vmem [#allocation2], 12
          %607 = vst.msk [vmem:[%s606] sm:$0xf] %vm578, %v604
          %608 = vrot.lane.b32.xlu0 %v577, 104
          %v609 = vpop.permute.xlu0 %608
          %s611 = scalar_lea.vmem [#allocation3], 12
          %612 = vst.msk [vmem:[%s611] sm:$0xf] %vm578, %v609
        $region88: #{tpu_custom_call.1} parent=59 // pred_fallthru
          _
        %v613 = vld [vmem:[%s427] sm:$0xff]
        %v614 = vpack.c.bf16 %v613, %v613
        %v615 = vld [vmem:[#allocation11] sm:$0xf]
        %v616 = vld [vmem:[#allocation11 + $0x4] sm:$0xf]
        %v617 = vld [vmem:[#allocation11 + $0x8] sm:$0xf]
        %v618 = vld [vmem:[#allocation11 + $0xc] sm:$0xf]
        %v619 = vld [vmem:[%s3] sm:$0x1]
        %v621 = vperm.slane %v619, 0
        %v627 = vunpack.c.l.b16 %v615
        %v628 = vunpack.c.l.b16 %v616
        %v629 = vunpack.c.l.b16 %v617
        %v630 = vunpack.c.l.b16 %v618
        %v631 = vpack.c.b16 %v628, %v627
        %v632 = vpack.c.b16 %v630, %v629
        %vm635 = vcmask 261120
        %v637 = vsel %vm635, %v614, 0
        %639 = vmatpush.bf16.msra.mxu0 0
        %640 = vmatpush.bf16.msra.mxu0 0
        %641 = vmatpush.bf16.msra.mxu0 0
        %642 = vmatpush.bf16.msra.mxu0 0
        %643 = vmatpush.bf16.msra.mxu0 0
        %644 = vmatpush.bf16.msra.mxu0 0
        %645 = vmatpush.bf16.msra.mxu0 %v632
        %646 = vmatpush.bf16.msra.mxu0 %v631
        %647 = vmatmul.bf16.gmra.mxu0 %v637
        %v648 = vpop.f32.mrf.mxu0
        %v649 = vadd.f32 %v621, %v648
        %v650 = vpop.f32.mrf.mxu0
        %651 = vdwg.mxu0
        %v652 = vpack.c.bf16 %v649, %v649
        %vm653 = vcmask 60416
        %654 = vst.msk [vmem:[#allocation4] sm:$0xf] %vm653, %v652
        %656 = vrot.lane.b32.xlu0 %v652, 120
        %v657 = vpop.permute.xlu0 %656
        %s659 = scalar_lea.vmem [#allocation4], 4
        %660 = vst.msk [vmem:[%s659] sm:$0xf] %vm653, %v657
        %661 = vrot.lane.b32.xlu0 %v652, 112
        %v662 = vpop.permute.xlu0 %661
        %s664 = scalar_lea.vmem [#allocation4], 8
        %665 = vst.msk [vmem:[%s664] sm:$0xf] %vm653, %v662
        %666 = vrot.lane.b32.xlu0 %v652, 104
        %v667 = vpop.permute.xlu0 %666
        %s669 = scalar_lea.vmem [#allocation4], 12
        %670 = vst.msk [vmem:[%s669] sm:$0xf] %vm653, %v667
        %v671 = vld [vmem:[#allocation4] sm:$0xf]
        %v672 = vld [vmem:[#allocation4 + $0x4] sm:$0xf]
        %v673 = vld [vmem:[#allocation4 + $0x8] sm:$0xf]
        %v674 = vld [vmem:[#allocation4 + $0xc] sm:$0xf]
        %v675 = vld [vmem:[#allocation2] sm:$0xf]
        %v676 = vld [vmem:[#allocation2 + $0x4] sm:$0xf]
        %v677 = vld [vmem:[#allocation2 + $0x8] sm:$0xf]
        %v678 = vld [vmem:[#allocation2 + $0xc] sm:$0xf]
        %vm679 = vcmask 64512
        %v681 = vsel %vm679, %v671, 0
        %v684 = vsel %vm679, %v675, 0
        %686 = vmatpush.bf16.xpose.msra.mxu0 0
        %687 = vmatpush.bf16.xpose.msra.mxu0 0
        %688 = vmatpush.bf16.xpose.msra.mxu0 0
        %689 = vmatpush.bf16.xpose.msra.mxu0 0
        %690 = vmatpush.bf16.xpose.msra.mxu0 0
        %691 = vmatpush.bf16.xpose.msra.mxu0 0
        %692 = vmatpush.bf16.xpose.msra.mxu0 0
        %693 = vmatpush.bf16.xpose.msra.mxu0 %v684
        %694 = vmatmul.bf16.gmra.mxu0 %v681
        %v695 = vpop.f32.mrf.mxu0
        %v696 = vadd.f32 0.0, %v695
        %v697 = vpop.f32.mrf.mxu0
        %698 = vdwg.mxu0
        %v700 = vsel %vm679, %v672, 0
        %v703 = vsel %vm679, %v676, 0
        %705 = vmatpush.bf16.xpose.msra.mxu0 0
        %706 = vmatpush.bf16.xpose.msra.mxu0 0
        %707 = vmatpush.bf16.xpose.msra.mxu0 0
        %708 = vmatpush.bf16.xpose.msra.mxu0 0
        %709 = vmatpush.bf16.xpose.msra.mxu0 0
        %710 = vmatpush.bf16.xpose.msra.mxu0 0
        %711 = vmatpush.bf16.xpose.msra.mxu0 0
        %712 = vmatpush.bf16.xpose.msra.mxu0 %v703
        %713 = vmatmul.bf16.gmra.mxu0 %v700
        %v714 = vpop.f32.mrf.mxu0
        %v715 = vadd.f32 0.0, %v714
        %v716 = vpop.f32.mrf.mxu0
        %717 = vdwg.mxu0
        %v719 = vsel %vm679, %v673, 0
        %v722 = vsel %vm679, %v677, 0
        %724 = vmatpush.bf16.xpose.msra.mxu0 0
        %725 = vmatpush.bf16.xpose.msra.mxu0 0
        %726 = vmatpush.bf16.xpose.msra.mxu0 0
        %727 = vmatpush.bf16.xpose.msra.mxu0 0
        %728 = vmatpush.bf16.xpose.msra.mxu0 0
        %729 = vmatpush.bf16.xpose.msra.mxu0 0
        %730 = vmatpush.bf16.xpose.msra.mxu0 0
        %731 = vmatpush.bf16.xpose.msra.mxu0 %v722
        %732 = vmatmul.bf16.gmra.mxu0 %v719
        %v733 = vpop.f32.mrf.mxu0
        %v734 = vadd.f32 0.0, %v733
        %v735 = vpop.f32.mrf.mxu0
        %736 = vdwg.mxu0
        %v738 = vsel %vm679, %v674, 0
        %v741 = vsel %vm679, %v678, 0
        %743 = vmatpush.bf16.xpose.msra.mxu0 0
        %744 = vmatpush.bf16.xpose.msra.mxu0 0
        %745 = vmatpush.bf16.xpose.msra.mxu0 0
        %746 = vmatpush.bf16.xpose.msra.mxu0 0
        %747 = vmatpush.bf16.xpose.msra.mxu0 0
        %748 = vmatpush.bf16.xpose.msra.mxu0 0
        %749 = vmatpush.bf16.xpose.msra.mxu0 0
        %750 = vmatpush.bf16.xpose.msra.mxu0 %v741
        %751 = vmatmul.bf16.gmra.mxu0 %v738
        %v752 = vpop.f32.mrf.mxu0
        %v753 = vadd.f32 0.0, %v752
        %v754 = vpop.f32.mrf.mxu0
        %755 = vdwg.mxu0
        %v756 = vsel %vm679, %v696, -inf
        %757 = vmax.xlane.f32.xlu0 %v756
        %v758 = vpop.xlane.xlu0 %757
        %v759 = vsel %vm679, %v715, -inf
        %760 = vmax.xlane.f32.xlu0 %v759
        %v761 = vpop.xlane.xlu0 %760
        %v762 = vsel %vm679, %v734, -inf
        %763 = vmax.xlane.f32.xlu0 %v762
        %v764 = vpop.xlane.xlu0 %763
        %v765 = vsel %vm679, %v753, -inf
        %766 = vmax.xlane.f32.xlu0 %v765
        %v767 = vpop.xlane.xlu0 %766
        %v768 = vsub.f32 %v696, %v758
        %v769 = vsub.f32 %v715, %v761
        %v770 = vsub.f32 %v734, %v764
        %v771 = vsub.f32 %v753, %v767
        %v772 = vmul.f32 %v768, 1.442695
        %v773 = vpow.pop %v772
        %v774 = vmul.f32 %v769, 1.442695
        %v775 = vpow.pop %v774
        %v776 = vmul.f32 %v770, 1.442695
        %v777 = vpow.pop %v776
        %v778 = vmul.f32 %v771, 1.442695
        %v779 = vpow.pop %v778
        %v780 = vsel %vm679, %v773, 0.0
        %781 = vadd.xlane.f32.xlu0 %v780
        %v782 = vpop.xlane.xlu0 %781
        %v783 = vsel %vm679, %v775, 0.0
        %784 = vadd.xlane.f32.xlu0 %v783
        %v785 = vpop.xlane.xlu0 %784
        %v786 = vsel %vm679, %v777, 0.0
        %787 = vadd.xlane.f32.xlu0 %v786
        %v788 = vpop.xlane.xlu0 %787
        %v789 = vsel %vm679, %v779, 0.0
        %790 = vadd.xlane.f32.xlu0 %v789
        %v791 = vpop.xlane.xlu0 %790
        %v792 = vrcp.pop %v782
        %v793 = vrcp.pop %v785
        %v794 = vrcp.pop %v788
        %v795 = vrcp.pop %v791
        %v796 = vmul.f32 %v773, %v792
        %v797 = vmul.f32 %v775, %v793
        %v798 = vmul.f32 %v777, %v794
        %v799 = vmul.f32 %v779, %v795
        %v800 = vpack.c.bf16 %v796, %v796
        %v801 = vpack.c.bf16 %v797, %v797
        %v802 = vpack.c.bf16 %v798, %v798
        %v803 = vpack.c.bf16 %v799, %v799
        %v804 = vld [vmem:[#allocation3] sm:$0xf]
        %v805 = vld [vmem:[#allocation3 + $0x4] sm:$0xf]
        %v806 = vld [vmem:[#allocation3 + $0x8] sm:$0xf]
        %v807 = vld [vmem:[#allocation3 + $0xc] sm:$0xf]
        %v809 = vsel %vm679, %v800, 0
        %vm811 = vcmask 1043456
        %v813 = vsel %vm811, %v804, 0
        %815 = vmatpush.bf16.msra.mxu0 0
        %816 = vmatpush.bf16.msra.mxu0 0
        %817 = vmatpush.bf16.msra.mxu0 0
        %818 = vmatpush.bf16.msra.mxu0 0
        %819 = vmatpush.bf16.msra.mxu0 0
        %820 = vmatpush.bf16.msra.mxu0 0
        %821 = vmatpush.bf16.msra.mxu0 0
        %822 = vmatpush.bf16.msra.mxu0 %v813
        %823 = vmatmul.bf16.gmra.mxu0 %v809
        %v824 = vpop.f32.mrf.mxu0
        %v825 = vadd.f32 0.0, %v824
        %v826 = vpop.f32.mrf.mxu0
        %827 = vdwg.mxu0
        %v829 = vsel %vm679, %v801, 0
        %v832 = vsel %vm811, %v805, 0
        %834 = vmatpush.bf16.msra.mxu0 0
        %835 = vmatpush.bf16.msra.mxu0 0
        %836 = vmatpush.bf16.msra.mxu0 0
        %837 = vmatpush.bf16.msra.mxu0 0
        %838 = vmatpush.bf16.msra.mxu0 0
        %839 = vmatpush.bf16.msra.mxu0 0
        %840 = vmatpush.bf16.msra.mxu0 0
        %841 = vmatpush.bf16.msra.mxu0 %v832
        %842 = vmatmul.bf16.gmra.mxu0 %v829
        %v843 = vpop.f32.mrf.mxu0
        %v844 = vadd.f32 0.0, %v843
        %v845 = vpop.f32.mrf.mxu0
        %846 = vdwg.mxu0
        %v848 = vsel %vm679, %v802, 0
        %v851 = vsel %vm811, %v806, 0
        %853 = vmatpush.bf16.msra.mxu0 0
        %854 = vmatpush.bf16.msra.mxu0 0
        %855 = vmatpush.bf16.msra.mxu0 0
        %856 = vmatpush.bf16.msra.mxu0 0
        %857 = vmatpush.bf16.msra.mxu0 0
        %858 = vmatpush.bf16.msra.mxu0 0
        %859 = vmatpush.bf16.msra.mxu0 0
        %860 = vmatpush.bf16.msra.mxu0 %v851
        %861 = vmatmul.bf16.gmra.mxu0 %v848
        %v862 = vpop.f32.mrf.mxu0
        %v863 = vadd.f32 0.0, %v862
        %v864 = vpop.f32.mrf.mxu0
        %865 = vdwg.mxu0
        %v867 = vsel %vm679, %v803, 0
        %v870 = vsel %vm811, %v807, 0
        %872 = vmatpush.bf16.msra.mxu0 0
        %873 = vmatpush.bf16.msra.mxu0 0
        %874 = vmatpush.bf16.msra.mxu0 0
        %875 = vmatpush.bf16.msra.mxu0 0
        %876 = vmatpush.bf16.msra.mxu0 0
        %877 = vmatpush.bf16.msra.mxu0 0
        %878 = vmatpush.bf16.msra.mxu0 0
        %879 = vmatpush.bf16.msra.mxu0 %v870
        %880 = vmatmul.bf16.gmra.mxu0 %v867
        %v881 = vpop.f32.mrf.mxu0
        %v882 = vadd.f32 0.0, %v881
        %v883 = vpop.f32.mrf.mxu0
        %884 = vdwg.mxu0
        %v885 = vpack.c.bf16 %v825, %v825
        %v886 = vpack.c.bf16 %v844, %v844
        %v887 = vpack.c.bf16 %v863, %v863
        %v888 = vpack.c.bf16 %v882, %v882
        %889 = vst.msk [vmem:[#allocation5] sm:$0xf] %vm653, %v885
        %891 = vrot.lane.b32.xlu0 %v886, 8
        %v892 = vpop.permute.xlu0 %891
        %vm894 = vcmask 126016
        %895 = vst.msk [vmem:[#allocation5] sm:$0xf] %vm894, %v892
        %897 = vrot.lane.b32.xlu0 %v887, 16
        %v898 = vpop.permute.xlu0 %897
        %vm900 = vcmask 191616
        %901 = vst.msk [vmem:[#allocation5] sm:$0xf] %vm900, %v898
        %903 = vrot.lane.b32.xlu0 %v888, 24
        %v904 = vpop.permute.xlu0 %903
        %vm906 = vcmask 257216
        %907 = vst.msk [vmem:[#allocation5] sm:$0xf] %vm906, %v904
        %v908 = vld [vmem:[#allocation5] sm:$0xf]
        %v909 = vld [vmem:[#allocation15] sm:$0xf]
        %v910 = vld [vmem:[#allocation15 + $0x4] sm:$0xf]
        %v911 = vld [vmem:[#allocation15 + $0x8] sm:$0xf]
        %v912 = vld [vmem:[#allocation15 + $0xc] sm:$0xf]
        %v913 = vld [vmem:[%s9] sm:$0x1]
        %v915 = vperm.slane %v913, 0
        %v921 = vunpack.c.l.b16 %v909
        %v922 = vunpack.c.l.b16 %v910
        %v923 = vunpack.c.l.b16 %v911
        %v924 = vunpack.c.l.b16 %v912
        %v925 = vpack.c.b16 %v922, %v921
        %v926 = vpack.c.b16 %v924, %v923
        %v930 = vsel %vm635, %v908, 0
        %932 = vmatpush.bf16.msra.mxu0 0
        %933 = vmatpush.bf16.msra.mxu0 0
        %934 = vmatpush.bf16.msra.mxu0 0
        %935 = vmatpush.bf16.msra.mxu0 0
        %936 = vmatpush.bf16.msra.mxu0 0
        %937 = vmatpush.bf16.msra.mxu0 0
        %938 = vmatpush.bf16.msra.mxu0 %v926
        %939 = vmatpush.bf16.msra.mxu0 %v925
        %940 = vmatmul.bf16.gmra.mxu0 %v930
        %v941 = vpop.f32.mrf.mxu0
        %v942 = vadd.f32 %v915, %v941
        %v943 = vpop.f32.mrf.mxu0
        %944 = vdwg.mxu0
        %945 = vst.msk [vmem:[%s499] sm:$0xff] %vm635, %v942
        %s946 = sand.u32 %s276, 1
        %s947 = scalar_lea.sflag [#allocation8], %s946
        %s948 = sand.u32 %s276, 1
        %s949 = smul.addr %s948, 8
        %s950 = scalar_lea.vmem [#allocation17], %s949
        // Predicated region
        $region89: #{tpu_custom_call.1} parent=59 // pred_check
          %p951 = pneg %p286
        $region90: #{tpu_custom_call.1} parent=59 // pred_check_branch
          %953 = sbr.rel (%p951) target = $region92
        $region91: #{tpu_custom_call.1} parent=59 // pred_region
          %955 = vsyncadd %s947, 0
          %s956 = smul.addr %s36, 2
          %s957 = sadd.s32 %s37, %s956
          %s958 = smul.addr %s957, 8
          %s959 = scalar_lea.hbm %s10, %s958
          %s961 = sshll.u32 %s950, 4
          %s962 = int_to_ptr.vmem [resolvable:$true] %s961
          %s963 = sshll.u32 %s959, 4
          %s964 = int_to_ptr.hbm [resolvable:$true] %s963
          %966 = dma.vmem_to_hbm [thread:$0]  %s962, 128, %s964, %s947
        $region92: #{tpu_custom_call.1} parent=59 // pred_fallthru
          _
      $region60: #{tpu_custom_call.1} parent=5 // pred_fallthru
        _
      %p967 = scmp.le.s32.totalorder 2, %s27
      // Predicated region
      $region93: #{tpu_custom_call.1} parent=5 // pred_check
        %p968 = pneg %p967
      $region94: #{tpu_custom_call.1} parent=5 // pred_check_branch
        %970 = sbr.rel (%p968) target = $region96
      $region95: #{tpu_custom_call.1} parent=5 // pred_region
        %s971 = ssub.s32 %s27, 2
        // Predicated region
        $region97: #{tpu_custom_call.1} parent=95 // pred_check
          %p972 = pneg %p292
        $region98: #{tpu_custom_call.1} parent=95 // pred_check_branch
          %974 = sbr.rel (%p972) target = $region100
        $region99: #{tpu_custom_call.1} parent=95 // pred_region
          %s975 = sand.u32 %s277, 1
          %s976 = scalar_lea.sflag [#allocation8], %s975
          %s977 = sand.u32 %s277, 1
          %s978 = smul.addr %s977, 8
          %s979 = scalar_lea.vmem [#allocation17], %s978
          %981 = dma.done %s976, 128
        $region100: #{tpu_custom_call.1} parent=95 // pred_fallthru
          _
      $region96: #{tpu_custom_call.1} parent=5 // pred_fallthru
        _
    $region6: #{tpu_custom_call.1} parent=1 // loop_footer
      %s31 = sadd.s32 1, %s27
    $region7: #{tpu_custom_call.1} parent=1 // loop_footer_branch
      %26 = sbr.rel target = $region3
    $region8: #{tpu_custom_call.1} parent=1 // loop_exit
      _
    %982 = vsyncpa [#allocation7], 1
    %s983 = scalar_lea.sflag [#allocation7], 1
    %984 = vsyncpa %s983, 1
    %985 = vsyncpa [#allocation10], 1
    %s986 = scalar_lea.sflag [#allocation10], 1
    %987 = vsyncpa %s986, 1
    %988 = vsyncpa [#allocation13], 1
    %989 = vsyncpa [#allocation16], 1
    %990 = vsyncpa [#allocation8], 1
    %s991 = scalar_lea.sflag [#allocation8], 1
    %992 = vsyncpa %s991, 1

</llo_original>
